<compile_context>
chip_gen: v7x
topology: tpu7x:2x2x1
jax: 0.10.0
libtpu: 0.0.40
codegen_flags: <defaults>
</compile_context>

<pallas_src>
import jax
import jax.numpy as jnp
from jax.experimental import pallas as pl
from jax.experimental.pallas import tpu as pltpu

_LANES = 128
_SUBLANES = 8
_MAX_TILE_ROWS = 512  # (512, 128) int32 tile = 256 KiB, tiny vs VMEM on v5e/v6e/v7x


def _fill_kernel(num_classes_ref, out_ref):
    # Pure constant fill of the current output tile; no input tile is read.
    val = num_classes_ref[0].astype(out_ref.dtype)
    out_ref[...] = jnp.full(out_ref.shape, val, dtype=out_ref.dtype)


def unconditional_classes_fill(classes, num_classes):
    """Pallas equivalent of `torch.zeros_like(classes) + num_classes`.

    Note: for a tiny class-id vector, `jnp.full(classes.shape, num_classes,
    classes.dtype)` is strictly cheaper; the Pallas path is kept because this
    module is implemented as a kernel (and it pays off when the output is
    large or when the fill is fused into a bigger custom pipeline).
    """
    orig_shape = classes.shape
    dtype = classes.dtype
    n = int(classes.size)
    if n == 0:
        return jnp.zeros(orig_shape, dtype=dtype)

    # Lane-dense layout: [rows_total, 128], rows a multiple of 8.
    rows_needed = pl.cdiv(n, _LANES)
    rows_needed = pl.cdiv(rows_needed, _SUBLANES) * _SUBLANES
    tile_rows = min(_MAX_TILE_ROWS, rows_needed)
    rows_total = pl.cdiv(rows_needed, tile_rows) * tile_rows
    grid = (rows_total // tile_rows,)

    # Scalar operand lives in SMEM via scalar prefetch (no recompile per value).
    num_classes_arr = jnp.asarray([num_classes], dtype=jnp.int32)

    out = pl.pallas_call(
        _fill_kernel,
        out_shape=jax.ShapeDtypeStruct((rows_total, _LANES), dtype),
        grid_spec=pltpu.PrefetchScalarGridSpec(
            num_scalar_prefetch=1,
            grid=grid,
            in_specs=[],  # no tensor inputs: the fill never reads `classes`
            out_specs=pl.BlockSpec((tile_rows, _LANES), lambda i, nc: (i, 0)),
        ),
        compiler_params=pltpu.CompilerParams(
            dimension_semantics=("parallel",),
        ),
    )(num_classes_arr)

    # Crop the lane/sublane padding and restore the original shape.
    return out.reshape(-1)[:n].reshape(orig_shape)


class UnconditionalClassesAdapter:
    """JAX/Pallas port of xdiffusion.context.UnconditionalClassesAdapter."""

    def __init__(self, num_classes, **kwargs):
        self._num_classes = num_classes

    def __call__(self, context, **kwargs):
        new_context = dict(context)  # context.copy()
        classes = context["classes"]
        new_context["classes"] = unconditional_classes_fill(
            classes, self._num_classes
        )
        return new_context


if __name__ == "__main__":
    key = jax.random.PRNGKey(0)

    # Small, deterministic example context. `classes` is a batch of integer
    # class ids; the extra key exercises the dict-copy behavior.
    batch = 2
    num_classes = 10
    classes = jax.random.randint(key, (batch,), 0, num_classes, dtype=jnp.int32)
    context = {
        "classes": classes,
        "timestep": jnp.arange(batch, dtype=jnp.int32),
    }

    adapter = UnconditionalClassesAdapter(num_classes=num_classes)
    new_context = adapter(context)

    result = jax.block_until_ready(new_context["classes"])

    # Correctness checks against the reference semantics.
    expected = jnp.zeros_like(classes) + num_classes
    assert result.shape == classes.shape
    assert result.dtype == classes.dtype
    assert bool(jnp.all(result == expected))
    # Original context untouched, other keys carried over.
    assert bool(jnp.all(context["classes"] == classes))
    assert bool(jnp.all(new_context["timestep"] == context["timestep"]))

    # Also exercise the multi-tile grid path (2 x 40000 ints -> 2 grid steps).
    big = jnp.zeros((2, 40000), dtype=jnp.int32)
    big_out = jax.block_until_ready(unconditional_classes_fill(big, 7))
    assert big_out.shape == big.shape and big_out.dtype == big.dtype
    assert bool(jnp.all(big_out == 7))

    print("KERNEL_OK")
</pallas_src>

<mosaic_0001>
module attributes {stable_mosaic.version = 11 : i64} {
  func.func @_fill_kernel(%arg0: i32, %arg1: memref<1xi32, #tpu.memory_space<smem>>, %arg2: memref<8x128xi32, #tpu.memory_space<vmem>>) attributes {dimension_semantics = [#tpu.dimension_semantics<parallel>], iteration_bounds = array<i64: 1>, scalar_prefetch = 1 : i64, scratch_operands = 0 : i64, tpu.core_type = #tpu.core_type<tc>, window_params = [{transform_indices = @transform_0, window_bounds = array<i64: 8, 128>}]} {
    %c0 = arith.constant 0 : index
    %0 = memref.load %arg1[%c0] : memref<1xi32, #tpu.memory_space<smem>>
    %1 = vector.broadcast %0 : i32 to vector<8x128xi32>
    %c0_0 = arith.constant 0 : index
    %c0_1 = arith.constant 0 : index
    %2 = vector.load %arg2[%c0_0, %c0_1] : memref<8x128xi32, #tpu.memory_space<vmem>>, vector<8x128xi32>
    tpu.vector_store %arg2[%c0_0, %c0_1], %1 {strides = array<i32>} : memref<8x128xi32, #tpu.memory_space<vmem>>, vector<8x128xi32>,
    return
  }
  func.func @transform_0(%arg0: i32, %arg1: memref<1xi32, #tpu.memory_space<smem>>) -> (i32, i32) {
    %c0_i32 = arith.constant 0 : i32
    %c0_i32_0 = arith.constant 0 : i32
    return %arg0, %c0_i32 : i32, i32
  }
}

</mosaic_0001>

<llo_original>
// kernel: tpu_custom_call.1
$region0: #{tpu_custom_call.1}
  #allocation0 [shape = 'u32[]', space=smem, size = 0x4, offset = 0x4, fixed_abs, tag = 'smem constant byte address 0x4 - core index']
  #allocation1 [shape = 'u32[144,128]{1,0:T(1,128)}', space=vmem, size = 0x12000, scoped, tag = 'internal scratch']
  #allocation2 [shape = 's32[1]{0}', space=sflag, size = 0x4, scoped, tag = 'scoped memory for tpu_custom_call.1']
  #allocation3 [shape = 's32[1]{0:T(128)S(6)}', space=smem, size = 0x200, scoped, tag = 'prefetched SMEM operand 0']
  %s0 = inlined_call_operand.<no memory space> [shape: s32[1], index: 0, kind: input, shape index: {}]
  %s1 = inlined_call_operand.hbm [shape: s32[8,128], index: 1, kind: output, shape index: {}]
  %s2 = sld [smem:[#allocation0]]
  $region10: #{tpu_custom_call.1} parent=0
    _
  %s4 = ssub.s32 1, %s2
  %s5 = scalar_select 0, %s4, %s2
  %6 = sst [smem:[#allocation3]] %s0
  $region1: #{tpu_custom_call.1} parent=0
    #allocation4 [shape = 'u8[4096]{0}', space=vmem, size = 0x1000, scoped, tag = 'output window, operand 0, single buffered']
    #allocation5 [shape = 's32[1]{0}', space=sflag, size = 0x4, scoped, tag = 'scoped memory for tpu_custom_call.1']
    %7 = vsyncpa [#allocation5], 0
    %s8 = sld [smem:[#allocation3]]
    %v9 = vstv %s8
    %10 = vst [vmem:[#allocation4] sm:$0xff] %v9
    // Predicated region
    $region2: #{tpu_custom_call.1} parent=1 // pred_check
      _
    $region3: #{tpu_custom_call.1} parent=1 // pred_check_branch
      %12 = sbr.rel (0) target = $region5
    $region4: #{tpu_custom_call.1} parent=1 // pred_region
      %s14 = ssub.s32 128, 128
      %15 = vsyncadd [#allocation5], %s14
      %s17 = sshll.u32 [#allocation4], 4
      %s18 = int_to_ptr.vmem [resolvable:$true] %s17
      %20 = dma.vmem_to_hbm [thread:$0]  %s18, 128, %s1, [#allocation5]
    $region5: #{tpu_custom_call.1} parent=1 // pred_fallthru
      _
    // Predicated region
    $region6: #{tpu_custom_call.1} parent=1 // pred_check
      _
    $region7: #{tpu_custom_call.1} parent=1 // pred_check_branch
      %22 = sbr.rel (0) target = $region9
    $region8: #{tpu_custom_call.1} parent=1 // pred_region
      %23 = dma.done [#allocation5], 128
    $region9: #{tpu_custom_call.1} parent=1 // pred_fallthru
      _
    %24 = vsyncpa [#allocation5], 1

</llo_original>
